<compile_context>
chip_gen: v7x
topology: tpu7x:2x2x1
jax: 0.10.0
libtpu: 0.0.40
codegen_flags: <defaults>
</compile_context>

<pallas_src>
import functools

import jax
import jax.numpy as jnp
from jax.experimental import pallas as pl
from jax.experimental.pallas import tpu as pltpu


# ----------------------------------------------------------------------------
# Kernels
# ----------------------------------------------------------------------------
def _oss_kernel_row_params(x_ref, p_ref, o_ref, *, quant_min, quant_max, use_floor):
    """(N*C, H*W) layout: p_ref is (tr, 3) = [offset|mult|shift] per row."""
    off = p_ref[:, 0:1]
    mult = p_ref[:, 1:2]
    shift = p_ref[:, 2:3]
    y = (x_ref[...] + off) * mult          # keep the reference two-multiply order
    y = y * shift
    y = jnp.floor(y) if use_floor else jnp.round(y)
    o_ref[...] = jnp.clip(y, quant_min, quant_max)


def _oss_kernel_col_params(x_ref, p_ref, o_ref, *, quant_min, quant_max, use_floor):
    """(N, C*H*W) layout: p_ref is (3, tc) = [offset; mult; shift] per column."""
    off = p_ref[0:1, :]
    mult = p_ref[1:2, :]
    shift = p_ref[2:3, :]
    y = (x_ref[...] + off) * mult
    y = y * shift
    y = jnp.floor(y) if use_floor else jnp.round(y)
    o_ref[...] = jnp.clip(y, quant_min, quant_max)


# ----------------------------------------------------------------------------
# Tiling / layout policy
# ----------------------------------------------------------------------------
def _pick_tiles(rows, cols, itemsize, *, target_bytes=2 * 1024 * 1024):
    """Pick (tr, tc) with tc a multiple of 128 (or full cols) and tr a multiple
    of 8 (or full rows), tr*tc*itemsize <= ~target_bytes, biased toward a wide
    lane axis.  Ragged edges are left to Pallas' masked edge blocks (pl.cdiv
    grid), never handled by blowing the tile up to the full dimension."""
    # --- lane (last) dim: as wide as the budget allows ---
    if cols <= 128:
        tc = cols                                              # full (small) dim
    else:
        # widest 128-multiple that still leaves room for >= 8 rows
        tc_budget = max(128, (target_bytes // (8 * itemsize)) // 128 * 128)
        if cols % 128 == 0:
            tc = min(cols, tc_budget)
        elif cols * 8 * itemsize <= target_bytes:
            tc = cols                                          # full ragged dim, still budgeted
        else:
            tc = min((cols // 128) * 128, tc_budget)
    # --- sublane (second-last) dim: whatever fits the remaining budget ---
    if rows <= 8:
        tr = rows                                              # full (small) dim
    else:
        budget_rows = max(8, (target_bytes // max(1, tc * itemsize)) // 8 * 8)
        tr = max(8, min(budget_rows, (rows // 8) * 8))         # multiple of 8
    return tr, tc


def _lane_util(n):
    return n / (((n + 127) // 128) * 128)


def _prefer_row_layout(c, hw):
    """True -> (N*C, H*W) view with per-row params; False -> (N, C*H*W) view."""
    if hw % 128 == 0:
        return True
    if hw < 128:
        return False
    return _lane_util(hw) >= _lane_util(c * hw)


# ----------------------------------------------------------------------------
# Param packing
# ----------------------------------------------------------------------------
def _per_channel(p, c, dtype):
    p = jnp.asarray(p, dtype).reshape(-1)
    if p.size == 1:
        p = jnp.broadcast_to(p, (c,))
    return p                                                    # (C,)


def _row_params(offset, mult, shift_mult, n, c, dtype):
    cols = [
        jnp.broadcast_to(_per_channel(p, c, dtype).reshape(1, c), (n, c)).reshape(n * c, 1)
        for p in (offset, mult, shift_mult)
    ]
    return jnp.concatenate(cols, axis=1)                        # (N*C, 3)


def _col_params(offset, mult, shift_mult, c, hw, dtype):
    rows = [
        jnp.repeat(_per_channel(p, c, dtype), hw).reshape(1, c * hw)
        for p in (offset, mult, shift_mult)
    ]
    return jnp.concatenate(rows, axis=0)                        # (3, C*H*W)


# ----------------------------------------------------------------------------
# Public wrapper
# ----------------------------------------------------------------------------
def tinpu_offset_scale_shift(x_nchw, offset, mult, shift_mult, *,
                             quant_min, quant_max, use_floor=True,
                             target_tile_bytes=2 * 1024 * 1024):
    """Pallas TPU implementation of TINPUOffsetScaleShift.forward (ndim=4, dim=1).

    x_nchw: (N, C, H, W) float32
    offset, mult, shift_mult: (C,) float32 per-channel params or scalars.
    Returns: (N, C, H, W) float32
    """
    N, C, H, W = x_nchw.shape
    dtype = x_nchw.dtype
    itemsize = jnp.dtype(dtype).itemsize
    hw = H * W

    qmin, qmax = float(quant_min), float(quant_max)

    if _prefer_row_layout(C, hw):
        rows, cols = N * C, hw
        x2d = x_nchw.reshape(rows, cols)                        # free view
        params = _row_params(offset, mult, shift_mult, N, C, dtype)     # (N*C, 3)
        tr, tc = _pick_tiles(rows, cols, itemsize, target_bytes=target_tile_bytes)
        kernel = functools.partial(_oss_kernel_row_params,
                                   quant_min=qmin, quant_max=qmax, use_floor=use_floor)
        p_spec = pl.BlockSpec((tr, 3), lambda i, j: (i, 0))
    else:
        rows, cols = N, C * hw
        x2d = x_nchw.reshape(rows, cols)                        # free view
        params = _col_params(offset, mult, shift_mult, C, hw, dtype)    # (3, C*H*W)
        tr, tc = _pick_tiles(rows, cols, itemsize, target_bytes=target_tile_bytes)
        kernel = functools.partial(_oss_kernel_col_params,
                                   quant_min=qmin, quant_max=qmax, use_floor=use_floor)
        p_spec = pl.BlockSpec((3, tc), lambda i, j: (0, j))

    grid = (pl.cdiv(rows, tr), pl.cdiv(cols, tc))               # j (lanes) innermost

    out2d = pl.pallas_call(
        kernel,
        out_shape=jax.ShapeDtypeStruct((rows, cols), dtype),
        grid=grid,
        in_specs=[
            pl.BlockSpec((tr, tc), lambda i, j: (i, j)),
            p_spec,
        ],
        out_specs=pl.BlockSpec((tr, tc), lambda i, j: (i, j)),
        compiler_params=pltpu.CompilerParams(
            dimension_semantics=("parallel", "parallel")),
    )(x2d, params)

    return out2d.reshape(N, C, H, W)                            # free view back


# ----------------------------------------------------------------------------
# Pure-JAX reference + self-test
# ----------------------------------------------------------------------------
def _reference(x_nchw, offset, mult, shift_mult, quant_min, quant_max, use_floor=True):
    off = jnp.asarray(offset, x_nchw.dtype).reshape(1, -1, 1, 1)
    m = jnp.asarray(mult, x_nchw.dtype).reshape(1, -1, 1, 1)
    s = jnp.asarray(shift_mult, x_nchw.dtype).reshape(1, -1, 1, 1)
    y = (x_nchw + off) * m
    y = y * s
    y = jnp.floor(y) if use_floor else jnp.round(y)
    return jnp.clip(y, quant_min, quant_max)


if __name__ == "__main__":
    key = jax.random.PRNGKey(0)
    kx, ky = jax.random.split(key)
    quant_min, quant_max = -128.0, 127.0

    # Case 1: 128-aligned spatial (16x16) -> (N*C, H*W) row-param layout.
    N, C, H, W = 2, 4, 16, 16
    x = jax.random.normal(kx, (N, C, H, W), dtype=jnp.float32) * 20.0
    offset = jnp.arange(C, dtype=jnp.float32) * 0.5 - 1.0               # (C,)
    mult = jnp.array([64.0, 48.0, 96.0, 32.0], dtype=jnp.float32)       # (C,)
    shift_mult = jnp.full((C,), 2.0 ** -5, dtype=jnp.float32)           # (C,)

    out = tinpu_offset_scale_shift(x, offset, mult, shift_mult,
                                   quant_min=quant_min, quant_max=quant_max,
                                   use_floor=True)
    out = jax.block_until_ready(out)
    ref = _reference(x, offset, mult, shift_mult, quant_min, quant_max, True)
    assert out.shape == (N, C, H, W)
    assert float(jnp.max(jnp.abs(out - ref))) == 0.0

    # Case 2: small unaligned spatial (7x7) -> (N, C*H*W) col-param layout,
    # exercises the lane-density fallback and the round (use_floor=False) path.
    N2, C2, H2, W2 = 2, 3, 7, 7
    x2 = jax.random.normal(ky, (N2, C2, H2, W2), dtype=jnp.float32) * 20.0
    offset2 = jnp.array([-1.0, 0.5, 2.0], dtype=jnp.float32)
    mult2 = jnp.array([80.0, 40.0, 20.0], dtype=jnp.float32)
    shift2 = jnp.full((C2,), 2.0 ** -4, dtype=jnp.float32)

    out2 = tinpu_offset_scale_shift(x2, offset2, mult2, shift2,
                                    quant_min=quant_min, quant_max=quant_max,
                                    use_floor=False)
    out2 = jax.block_until_ready(out2)
    ref2 = _reference(x2, offset2, mult2, shift2, quant_min, quant_max, False)
    assert out2.shape == (N2, C2, H2, W2)
    assert float(jnp.max(jnp.abs(out2 - ref2))) == 0.0

    print("KERNEL_OK")
</pallas_src>

<mosaic_0001>
module attributes {stable_mosaic.version = 11 : i64} {
  func.func @_oss_kernel_row_params(%arg0: i32, %arg1: i32, %arg2: memref<8x256xf32, #tpu.memory_space<vmem>>, %arg3: memref<8x3xf32, #tpu.memory_space<vmem>>, %arg4: memref<8x256xf32, #tpu.memory_space<vmem>>) attributes {dimension_semantics = [#tpu.dimension_semantics<parallel>, #tpu.dimension_semantics<parallel>], iteration_bounds = array<i64: 1, 1>, scalar_prefetch = 0 : i64, scratch_operands = 0 : i64, tpu.core_type = #tpu.core_type<tc>, window_params = [{transform_indices = @transform_0, window_bounds = array<i64: 8, 256>}, {transform_indices = @transform_1, window_bounds = array<i64: 8, 3>}, {transform_indices = @transform_2, window_bounds = array<i64: 8, 256>}]} {
    %c0 = arith.constant 0 : index
    %c0_0 = arith.constant 0 : index
    %0 = vector.load %arg3[%c0, %c0_0] : memref<8x3xf32, #tpu.memory_space<vmem>>, vector<8x1xf32>
    %c0_1 = arith.constant 0 : index
    %c1 = arith.constant 1 : index
    %1 = vector.load %arg3[%c0_1, %c1] : memref<8x3xf32, #tpu.memory_space<vmem>>, vector<8x1xf32>
    %c0_2 = arith.constant 0 : index
    %c2 = arith.constant 2 : index
    %2 = vector.load %arg3[%c0_2, %c2] : memref<8x3xf32, #tpu.memory_space<vmem>>, vector<8x1xf32>
    %c0_3 = arith.constant 0 : index
    %c0_4 = arith.constant 0 : index
    %3 = vector.load %arg2[%c0_3, %c0_4] : memref<8x256xf32, #tpu.memory_space<vmem>>, vector<8x256xf32>
    %4 = vector.broadcast %0 : vector<8x1xf32> to vector<8x256xf32>
    %5 = arith.addf %3, %4 : vector<8x256xf32>
    %6 = vector.broadcast %1 : vector<8x1xf32> to vector<8x256xf32>
    %7 = arith.mulf %5, %6 : vector<8x256xf32>
    %8 = vector.broadcast %2 : vector<8x1xf32> to vector<8x256xf32>
    %9 = arith.mulf %7, %8 : vector<8x256xf32>
    %10 = math.floor %9 : vector<8x256xf32>
    %cst = arith.constant -1.280000e+02 : f32
    %cst_5 = arith.constant 1.270000e+02 : f32
    %11 = vector.broadcast %cst : f32 to vector<8x256xf32>
    %12 = arith.maximumf %11, %10 : vector<8x256xf32>
    %13 = vector.broadcast %cst_5 : f32 to vector<8x256xf32>
    %14 = arith.minimumf %13, %12 : vector<8x256xf32>
    %c0_6 = arith.constant 0 : index
    %c0_7 = arith.constant 0 : index
    %15 = vector.load %arg4[%c0_6, %c0_7] : memref<8x256xf32, #tpu.memory_space<vmem>>, vector<8x256xf32>
    tpu.vector_store %arg4[%c0_6, %c0_7], %14 {strides = array<i32>} : memref<8x256xf32, #tpu.memory_space<vmem>>, vector<8x256xf32>,
    return
  }
  func.func @transform_0(%arg0: i32, %arg1: i32) -> (i32, i32) {
    %c0_i32 = arith.constant 0 : i32
    return %arg0, %arg1 : i32, i32
  }
  func.func @transform_1(%arg0: i32, %arg1: i32) -> (i32, i32) {
    %c0_i32 = arith.constant 0 : i32
    %c0_i32_0 = arith.constant 0 : i32
    return %arg0, %c0_i32 : i32, i32
  }
  func.func @transform_2(%arg0: i32, %arg1: i32) -> (i32, i32) {
    %c0_i32 = arith.constant 0 : i32
    return %arg0, %arg1 : i32, i32
  }
}

</mosaic_0001>

<llo_original>
// kernel: tpu_custom_call.1
$region0: #{tpu_custom_call.1}
  #allocation0 [shape = 'u32[]', space=smem, size = 0x4, offset = 0x4, fixed_abs, tag = 'smem constant byte address 0x4 - core index']
  #allocation1 [shape = 'u32[144,128]{1,0:T(1,128)}', space=vmem, size = 0x12000, scoped, tag = 'internal scratch']
  %s0 = inlined_call_operand.hbm [shape: f32[8,256], index: 0, kind: input, shape index: {}]
  %s1 = inlined_call_operand.vmem [shape: f32[8,3], index: 1, kind: input, shape index: {}]
  %s2 = inlined_call_operand.hbm [shape: f32[8,256], index: 2, kind: output, shape index: {}]
  %s3 = sld [smem:[#allocation0]]
  $region22: #{tpu_custom_call.1} parent=0
    _
  %s5 = ssub.s32 1, %s3
  %s6 = scalar_select 0, %s5, %s3
  $region1: #{tpu_custom_call.1} parent=0
    #allocation2 [shape = 'u8[8192]{0}', space=vmem, size = 0x2000, scoped, tag = 'input window, operand 0, single buffered']
    #allocation3 [shape = 's32[1]{0}', space=sflag, size = 0x4, scoped, tag = 'scoped memory for tpu_custom_call.1']
    #allocation4 [shape = 's32[1]{0}', space=sflag, size = 0x4, scoped, tag = 'scoped memory for tpu_custom_call.1']
    #allocation5 [shape = 'u8[8192]{0}', space=vmem, size = 0x2000, scoped, tag = 'output window, operand 0, single buffered']
    %7 = vsyncpa [#allocation3], 0
    %8 = vsyncpa [#allocation4], 0
    // Predicated region
    $region2: #{tpu_custom_call.1} parent=1 // pred_check
      _
    $region3: #{tpu_custom_call.1} parent=1 // pred_check_branch
      %10 = sbr.rel (0) target = $region5
    $region4: #{tpu_custom_call.1} parent=1 // pred_region
      %s12 = ssub.s32 256, 256
      %13 = vsyncadd [#allocation3], %s12
      %s15 = sshll.u32 [#allocation2], 4
      %s16 = int_to_ptr.vmem [resolvable:$true] %s15
      %18 = dma.hbm_to_vmem [thread:$0]  %s0, 256, %s16, [#allocation3]
    $region5: #{tpu_custom_call.1} parent=1 // pred_fallthru
      _
    // Predicated region
    $region6: #{tpu_custom_call.1} parent=1 // pred_check
      _
    $region7: #{tpu_custom_call.1} parent=1 // pred_check_branch
      %20 = sbr.rel (0) target = $region9
    $region8: #{tpu_custom_call.1} parent=1 // pred_region
      _
    $region9: #{tpu_custom_call.1} parent=1 // pred_fallthru
      _
    // Predicated region
    $region10: #{tpu_custom_call.1} parent=1 // pred_check
      _
    $region11: #{tpu_custom_call.1} parent=1 // pred_check_branch
      %22 = sbr.rel (0) target = $region13
    $region12: #{tpu_custom_call.1} parent=1 // pred_region
      %23 = dma.done [#allocation3], 256
    $region13: #{tpu_custom_call.1} parent=1 // pred_fallthru
      _
    %v24 = vld [vmem:[%s1] sm:$0xff]
    %v25 = vld [vmem:[#allocation2] sm:$0xff]
    %v26 = vld [vmem:[#allocation2 + $0x8] sm:$0xff]
    %28 = vset.pattern.permute.xlu0 0
    %29 = vperm.xlu0 %28, %v24
    %v30 = vpop.permute.xlu0 %29
    %v32 = vadd.f32 %v25, %v30
    %v33 = vadd.f32 %v26, %v30
    %34 = vset.pattern.permute.xlu0 1
    %35 = vperm.xlu0 %34, %v24
    %v36 = vpop.permute.xlu0 %35
    %v38 = vmul.f32 %v32, %v36
    %v39 = vmul.f32 %v33, %v36
    %40 = vset.pattern.permute.xlu0 2
    %41 = vperm.xlu0 %40, %v24
    %v42 = vpop.permute.xlu0 %41
    %v44 = vmul.f32 %v38, %v42
    %v45 = vmul.f32 %v39, %v42
    %v46 = vfloor.f32 %v44
    %v47 = vfloor.f32 %v45
    %v48 = vmax.f32 %v46, -128.0
    %v49 = vmax.f32 %v47, -128.0
    %v50 = vmin.f32 %v48, 127.0
    %v51 = vmin.f32 %v49, 127.0
    %52 = vst [vmem:[#allocation5] sm:$0xff] %v50
    %53 = vst [vmem:[#allocation5 + $0x8] sm:$0xff] %v51
    // Predicated region
    $region14: #{tpu_custom_call.1} parent=1 // pred_check
      _
    $region15: #{tpu_custom_call.1} parent=1 // pred_check_branch
      %55 = sbr.rel (0) target = $region17
    $region16: #{tpu_custom_call.1} parent=1 // pred_region
      %s57 = ssub.s32 256, 256
      %58 = vsyncadd [#allocation4], %s57
      %s60 = sshll.u32 [#allocation5], 4
      %s61 = int_to_ptr.vmem [resolvable:$true] %s60
      %63 = dma.vmem_to_hbm [thread:$0]  %s61, 256, %s2, [#allocation4]
    $region17: #{tpu_custom_call.1} parent=1 // pred_fallthru
      _
    // Predicated region
    $region18: #{tpu_custom_call.1} parent=1 // pred_check
      _
    $region19: #{tpu_custom_call.1} parent=1 // pred_check_branch
      %65 = sbr.rel (0) target = $region21
    $region20: #{tpu_custom_call.1} parent=1 // pred_region
      %66 = dma.done [#allocation4], 256
    $region21: #{tpu_custom_call.1} parent=1 // pred_fallthru
      _
    %67 = vsyncpa [#allocation3], 1
    %68 = vsyncpa [#allocation4], 1

</llo_original>
